<compile_context>
chip_gen: v5e
topology: v5e:2x2
jax: 0.10.0
libtpu: 0.0.40
codegen_flags: <defaults>
</compile_context>

<pallas_src>
import functools

import jax
import jax.numpy as jnp
from jax.experimental import pallas as pl
from jax.experimental.pallas import tpu as pltpu


_LANE = 128
_PER_BUF_BUDGET = 4 * 1024 * 1024   # bytes per pipelined x buffer (2 in + 2 out ≈ 16 MiB)
_T_MAX = 8192                       # lane-tile cap
_VMEM_LIMIT = 32 * 1024 * 1024      # safe on v5e/v6e (128 MiB) and v7x (64 MiB physical)


def _round_up(v, m):
    return ((v + m - 1) // m) * m


def _choose_lane_tile(HW, C, itemsize):
    """Largest lane tile (multiple of 128) fitting the per-buffer VMEM budget,
    preferring the candidate that minimizes spatial padding waste."""
    t_budget = max(_LANE, (_PER_BUF_BUDGET // (C * itemsize)) // _LANE * _LANE)
    t_cap = min(t_budget, _T_MAX)
    hw128 = _round_up(HW, _LANE)
    if hw128 <= t_cap:
        return hw128
    best_t, best_pad = _LANE, None
    t = t_cap
    while t >= _LANE:
        padded = _round_up(HW, t)
        if best_pad is None or padded < best_pad or (padded == best_pad and t > best_t):
            best_t, best_pad = t, padded
        t -= _LANE
    return best_t


def _choose_batch_fold(N, C, T, HWp, itemsize):
    """Fold batch items into one block when the whole spatial axis fits one lane
    tile, but keep >= 2 grid steps (megacore / v7x dual-TC sharding)."""
    if HWp != T or N <= 1:
        return 1
    best = 1
    for cand in range(2, N + 1):
        if N % cand:
            continue
        if cand * C * T * itemsize > _PER_BUF_BUDGET:
            continue
        if N // cand >= 2:
            best = cand
    return best


def _layernorm_kernel(x_ref, gb_ref, o_ref, *, eps):
    # x_ref: (NB, C, T); gb_ref: (2, C, 1) with row 0 = gamma, row 1 = beta.
    x = x_ref[...].astype(jnp.float32)
    gb = gb_ref[...].astype(jnp.float32)
    mean = jnp.mean(x, axis=1, keepdims=True)                        # (NB, 1, T)
    var = jnp.mean(jnp.square(x - mean), axis=1, keepdims=True)      # unbiased=False
    inv = jax.lax.rsqrt(var + eps)
    y = (x - mean) * inv * gb[0:1] + gb[1:2]
    o_ref[...] = y.astype(o_ref.dtype)


def layer_norm_nchw(x, g, b, *, eps=1e-5):
    """x: (N, C, H, W); g, b: (1, C, 1, 1). Returns (N, C, H, W)."""
    N, C, H, W = x.shape
    HW = H * W
    itemsize = jnp.dtype(x.dtype).itemsize

    T = _choose_lane_tile(HW, C, itemsize)
    HWp = _round_up(HW, T)
    NB = _choose_batch_fold(N, C, T, HWp, itemsize)

    x3 = x.reshape(N, C, HW)
    if HWp != HW:
        x3 = jnp.pad(x3, ((0, 0), (0, 0), (0, HWp - HW)))
    gb = jnp.concatenate([g.reshape(1, C, 1), b.reshape(1, C, 1)], axis=0)  # (2, C, 1)

    grid = (N // NB, HWp // T)
    kernel = functools.partial(_layernorm_kernel, eps=eps)

    out3 = pl.pallas_call(
        kernel,
        out_shape=jax.ShapeDtypeStruct((N, C, HWp), x.dtype),
        grid_spec=pltpu.PrefetchScalarGridSpec(
            num_scalar_prefetch=0,
            grid=grid,
            in_specs=[
                pl.BlockSpec((NB, C, T), lambda n, t: (n, 0, t)),
                pl.BlockSpec((2, C, 1), lambda n, t: (0, 0, 0)),
            ],
            out_specs=pl.BlockSpec((NB, C, T), lambda n, t: (n, 0, t)),
        ),
        compiler_params=pltpu.CompilerParams(
            dimension_semantics=("parallel", "parallel"),
            vmem_limit_bytes=_VMEM_LIMIT,
        ),
    )(x3, gb)

    if HWp != HW:
        out3 = out3[:, :, :HW]
    return out3.reshape(N, C, H, W)


def _reference(x, g, b, eps=1e-5):
    xf = x.astype(jnp.float32)
    mean = jnp.mean(xf, axis=1, keepdims=True)
    var = jnp.mean((xf - mean) ** 2, axis=1, keepdims=True)
    return ((xf - mean) / jnp.sqrt(var + eps) * g + b).astype(x.dtype)


def _check(key, shape):
    N, C, H, W = shape
    x = jax.random.normal(key, (N, C, H, W), dtype=jnp.float32)
    # nn.Parameter(torch.ones(1, dim, 1, 1)) / torch.zeros(1, dim, 1, 1)
    g = jnp.ones((1, C, 1, 1), dtype=jnp.float32)
    b = jnp.zeros((1, C, 1, 1), dtype=jnp.float32)
    out = jax.block_until_ready(layer_norm_nchw(x, g, b, eps=1e-5))
    ref = _reference(x, g, b, eps=1e-5)
    assert out.shape == (N, C, H, W)
    assert jnp.allclose(out, ref, atol=1e-5, rtol=1e-5), f"mismatch vs reference for {shape}"


if __name__ == "__main__":
    key = jax.random.PRNGKey(0)
    k0, k1 = jax.random.split(key)
    # Base case matching the module's small-shape test.
    _check(k0, (2, 4, 16, 16))
    # Exercises the ragged-HW padding path (HW = 400 -> padded lane tile).
    _check(k1, (2, 16, 20, 20))
    print("KERNEL_OK")
</pallas_src>

<mosaic_0001>
module attributes {stable_mosaic.version = 11 : i64} {
  func.func @_layernorm_kernel(%arg0: i32, %arg1: i32, %arg2: memref<1x4x256xf32, #tpu.memory_space<vmem>>, %arg3: memref<2x4x1xf32, #tpu.memory_space<vmem>>, %arg4: memref<1x4x256xf32, #tpu.memory_space<vmem>>) attributes {dimension_semantics = [#tpu.dimension_semantics<parallel>, #tpu.dimension_semantics<parallel>], iteration_bounds = array<i64: 2, 1>, scalar_prefetch = 0 : i64, scratch_operands = 0 : i64, tpu.core_type = #tpu.core_type<tc>, window_params = [{transform_indices = @transform_0, window_bounds = array<i64: 1, 4, 256>}, {pipeline_mode = #tpu.pipeline_mode<synchronous>, transform_indices = @transform_1, window_bounds = array<i64: 2, 4, 1>}, {transform_indices = @transform_2, window_bounds = array<i64: 1, 4, 256>}]} {
    %c0 = arith.constant 0 : index
    %c0_0 = arith.constant 0 : index
    %c0_1 = arith.constant 0 : index
    %0 = vector.load %arg2[%c0, %c0_0, %c0_1] : memref<1x4x256xf32, #tpu.memory_space<vmem>>, vector<1x4x256xf32>
    %c0_2 = arith.constant 0 : index
    %c0_3 = arith.constant 0 : index
    %c0_4 = arith.constant 0 : index
    %1 = vector.load %arg3[%c0_2, %c0_3, %c0_4] : memref<2x4x1xf32, #tpu.memory_space<vmem>>, vector<2x4x1xf32>
    %cst = arith.constant dense<0.000000e+00> : vector<1x256xf32>
    %2 = vector.multi_reduction <add>, %0, %cst [1] : vector<1x4x256xf32> to vector<1x256xf32>
    %3 = vector.shape_cast %2 : vector<1x256xf32> to vector<1x1x256xf32>
    %cst_5 = arith.constant 4.000000e+00 : f32
    %4 = vector.broadcast %cst_5 : f32 to vector<1x1x256xf32>
    %5 = arith.divf %3, %4 : vector<1x1x256xf32>
    %6 = vector.broadcast %5 : vector<1x1x256xf32> to vector<1x4x256xf32>
    %7 = arith.subf %0, %6 : vector<1x4x256xf32>
    %8 = arith.mulf %7, %7 : vector<1x4x256xf32>
    %cst_6 = arith.constant dense<0.000000e+00> : vector<1x256xf32>
    %9 = vector.multi_reduction <add>, %8, %cst_6 [1] : vector<1x4x256xf32> to vector<1x256xf32>
    %10 = vector.shape_cast %9 : vector<1x256xf32> to vector<1x1x256xf32>
    %cst_7 = arith.constant 4.000000e+00 : f32
    %11 = vector.broadcast %cst_7 : f32 to vector<1x1x256xf32>
    %12 = arith.divf %10, %11 : vector<1x1x256xf32>
    %cst_8 = arith.constant 9.99999974E-6 : f32
    %13 = vector.broadcast %cst_8 : f32 to vector<1x1x256xf32>
    %14 = arith.addf %12, %13 : vector<1x1x256xf32>
    %15 = math.rsqrt %14 : vector<1x1x256xf32>
    %16 = vector.broadcast %5 : vector<1x1x256xf32> to vector<1x4x256xf32>
    %17 = arith.subf %0, %16 : vector<1x4x256xf32>
    %18 = vector.broadcast %15 : vector<1x1x256xf32> to vector<1x4x256xf32>
    %19 = arith.mulf %17, %18 : vector<1x4x256xf32>
    %20 = vector.extract_strided_slice %1 {offsets = [0, 0, 0], sizes = [1, 4, 1], strides = [1, 1, 1]} : vector<2x4x1xf32> to vector<1x4x1xf32>
    %21 = vector.broadcast %20 : vector<1x4x1xf32> to vector<1x4x256xf32>
    %22 = arith.mulf %19, %21 : vector<1x4x256xf32>
    %23 = vector.extract_strided_slice %1 {offsets = [1, 0, 0], sizes = [1, 4, 1], strides = [1, 1, 1]} : vector<2x4x1xf32> to vector<1x4x1xf32>
    %24 = vector.broadcast %23 : vector<1x4x1xf32> to vector<1x4x256xf32>
    %25 = arith.addf %22, %24 : vector<1x4x256xf32>
    %c0_9 = arith.constant 0 : index
    %c0_10 = arith.constant 0 : index
    %c0_11 = arith.constant 0 : index
    %26 = vector.load %arg4[%c0_9, %c0_10, %c0_11] : memref<1x4x256xf32, #tpu.memory_space<vmem>>, vector<1x4x256xf32>
    tpu.vector_store %arg4[%c0_9, %c0_10, %c0_11], %25 {strides = array<i32>} : memref<1x4x256xf32, #tpu.memory_space<vmem>>, vector<1x4x256xf32>,
    return
  }
  func.func @transform_0(%arg0: i32, %arg1: i32) -> (i32, i32, i32) {
    %c0_i32 = arith.constant 0 : i32
    %c0_i32_0 = arith.constant 0 : i32
    return %arg0, %c0_i32, %arg1 : i32, i32, i32
  }
  func.func @transform_1(%arg0: i32, %arg1: i32) -> (i32, i32, i32) {
    %c0_i32 = arith.constant 0 : i32
    %c0_i32_0 = arith.constant 0 : i32
    %c0_i32_1 = arith.constant 0 : i32
    %c0_i32_2 = arith.constant 0 : i32
    return %c0_i32, %c0_i32_0, %c0_i32_1 : i32, i32, i32
  }
  func.func @transform_2(%arg0: i32, %arg1: i32) -> (i32, i32, i32) {
    %c0_i32 = arith.constant 0 : i32
    %c0_i32_0 = arith.constant 0 : i32
    return %arg0, %c0_i32, %arg1 : i32, i32, i32
  }
}

</mosaic_0001>

<llo_original>
// kernel: tpu_custom_call.1
$region0: #{tpu_custom_call.1}
  #allocation0 [shape = 'u32[]', space=smem, size = 0x4, offset = 0x4, fixed_abs, tag = 'smem constant byte address 0x4 - core index']
  #allocation1 [shape = 'u32[72,128]{1,0:T(1,128)}', space=vmem, size = 0x9000, scoped, tag = 'internal scratch']
  %s0 = inlined_call_operand.hbm [shape: f32[2,4,256], index: 0, kind: input, shape index: {}]
  %s1 = inlined_call_operand.vmem [shape: f32[2,4,1], index: 1, kind: input, shape index: {}]
  %s2 = inlined_call_operand.hbm [shape: f32[2,4,256], index: 2, kind: output, shape index: {}]
  %s3 = sld [smem:[#allocation0]]
  $region45: #{tpu_custom_call.1} parent=0
    _
  %s5 = ssub.s32 1, %s3
  %s6 = scalar_select 0, %s5, %s3
  $region1: #{tpu_custom_call.1} parent=0
    #allocation2 [shape = 'u8[8192]{0}', space=vmem, size = 0x2000, scoped, tag = 'input window, operand 0']
    #allocation3 [shape = 's32[2]{0}', space=sflag, size = 0x8, scoped, tag = 'scoped memory for tpu_custom_call.1']
    #allocation4 [shape = 's32[2]{0}', space=sflag, size = 0x8, scoped, tag = 'scoped memory for tpu_custom_call.1']
    #allocation5 [shape = 'u8[8192]{0}', space=vmem, size = 0x2000, scoped, tag = 'output window, operand 0']
    %7 = vsyncpa [#allocation3], 0
    %s8 = scalar_lea.sflag [#allocation3], 1
    %9 = vsyncpa %s8, 0
    %10 = vsyncpa [#allocation4], 0
    %s11 = scalar_lea.sflag [#allocation4], 1
    %12 = vsyncpa %s11, 0
    loop: start=0, step=1, limit=4
    $region2: #{tpu_custom_call.1} parent=1 // loop_pre_header
      _
    $region3: #{tpu_custom_call.1} parent=1 // loop_header
      %s14 = sphi 0, %s18
      %p15 = scmp.ge.s32.totalorder %s14, 4
      %s21 = sphi 0, %s33
      %s22 = sphi 0, %s29
      %s23 = sphi 0, %s21
      %s24 = sphi 0, %s22
      %s25 = sphi 0, %s23
      %s26 = sphi 0, %s24
      %s38 = sphi 0, %s40
      %s41 = sphi 0, %s38
      %s42 = sphi 0, %s41
      %s58 = sphi 0, %s42
      %s62 = sphi 0, %s62
      %s64 = sphi 0, %s62
      %s65 = sphi 0, %s64
      %s79 = sphi 0, %s65
      %s87 = sphi 0, %s89
      %s90 = sphi 0, %s87
      %s91 = sphi 0, %s90
      %s107 = sphi 0, %s91
    $region4: #{tpu_custom_call.1} parent=1 // loop_header_branch
      %17 = sbr.rel (%p15) target = $region8
    $region5: #{tpu_custom_call.1} parent=1 // loop_body
      %s19 = ssub.s32 %s14, 1
      %s20 = ssub.s32 %s14, 2
      %s27 = sadd.s32 1, %s22
      %p28 = scmp.ge.s32.totalorder %s27, 1
      %s29 = scalar_select %p28, 0, %s27
      %s30 = sadd.s32 1, %s21
      %s31 = scalar_select %p28, %s30, %s21
      %p32 = scmp.ge.s32.totalorder %s31, 2
      %s33 = scalar_select %p32, 0, %s31
      %s34 = ssub.s32 %s21, %s33
      %s35 = ssub.s32 %s22, %s29
      %s36 = sor.u32 %s34, %s35
      %p37 = scmp.eq.s32.totalorder %s36, 0
      %s39 = sadd.s32 %s38, 1
      %s40 = scalar_select %p37, %s38, %s39
      %p43 = pneg %p37
      %p44 = scmp.eq.s32.totalorder %s14, 1
      %p45 = por %p43, %p44
      %p46 = scmp.ne.s32.totalorder %s38, %s41
      %p47 = scmp.eq.s32.totalorder %s14, 0
      %p48 = por %p46, %p47
      %p49 = scmp.ne.s32.totalorder %s38, %s41
      %p50 = scmp.eq.s32.totalorder %s19, 1
      %p51 = por %p49, %p50
      %p52 = scmp.ne.s32.totalorder %s41, %s42
      %p53 = scmp.eq.s32.totalorder %s19, 0
      %p54 = por %p52, %p53
      %p55 = scmp.ne.s32.totalorder %s41, %s42
      %p56 = scmp.eq.s32.totalorder %s20, 1
      %p57 = por %p55, %p56
      %p59 = scmp.ne.s32.totalorder %s42, %s58
      %p60 = scmp.eq.s32.totalorder %s20, 0
      %p61 = por %p59, %p60
      %s63 = sadd.s32 %s62, 1
      %p66 = scmp.eq.s32.totalorder %s14, 1
      %p67 = scmp.ne.s32.totalorder %s62, %s64
      %p68 = scmp.eq.s32.totalorder %s14, 0
      %p69 = por %p67, %p68
      %p70 = scmp.ne.s32.totalorder %s62, %s64
      %p71 = scmp.eq.s32.totalorder %s19, 1
      %p72 = por %p70, %p71
      %p73 = scmp.ne.s32.totalorder %s64, %s65
      %p74 = scmp.eq.s32.totalorder %s19, 0
      %p75 = por %p73, %p74
      %p76 = scmp.ne.s32.totalorder %s64, %s65
      %p77 = scmp.eq.s32.totalorder %s20, 1
      %p78 = por %p76, %p77
      %p80 = scmp.ne.s32.totalorder %s65, %s79
      %p81 = scmp.eq.s32.totalorder %s20, 0
      %p82 = por %p80, %p81
      %s83 = ssub.s32 %s21, %s33
      %s84 = ssub.s32 %s22, %s29
      %s85 = sor.u32 %s83, %s84
      %p86 = scmp.eq.s32.totalorder %s85, 0
      %s88 = sadd.s32 %s87, 1
      %s89 = scalar_select %p86, %s87, %s88
      %p92 = pneg %p86
      %p93 = scmp.eq.s32.totalorder %s14, 1
      %p94 = por %p92, %p93
      %p95 = scmp.ne.s32.totalorder %s87, %s90
      %p96 = scmp.eq.s32.totalorder %s14, 0
      %p97 = por %p95, %p96
      %p98 = scmp.ne.s32.totalorder %s87, %s90
      %p99 = scmp.eq.s32.totalorder %s19, 1
      %p100 = por %p98, %p99
      %p101 = scmp.ne.s32.totalorder %s90, %s91
      %p102 = scmp.eq.s32.totalorder %s19, 0
      %p103 = por %p101, %p102
      %p104 = scmp.ne.s32.totalorder %s90, %s91
      %p105 = scmp.eq.s32.totalorder %s20, 1
      %p106 = por %p104, %p105
      %p108 = scmp.ne.s32.totalorder %s91, %s107
      %p109 = scmp.eq.s32.totalorder %s20, 0
      %p110 = por %p108, %p109
      %p111 = scmp.le.s32.totalorder 1, %s14
      %p112 = scmp.lt.s32.totalorder %s14, 3
      %p113 = pnand %p111, %p112
      %p114 = pneg %p113
      // Predicated region
      $region9: #{tpu_custom_call.1} parent=5 // pred_check
        _
      $region10: #{tpu_custom_call.1} parent=5 // pred_check_branch
        %116 = sbr.rel (%p113) target = $region12
      $region11: #{tpu_custom_call.1} parent=5 // pred_region
        %s117 = ssub.s32 %s14, 1
        // Predicated region
        $region13: #{tpu_custom_call.1} parent=11 // pred_check
          %p118 = pneg %p75
        $region14: #{tpu_custom_call.1} parent=11 // pred_check_branch
          %120 = sbr.rel (%p118) target = $region16
        $region15: #{tpu_custom_call.1} parent=11 // pred_region
          _
        $region16: #{tpu_custom_call.1} parent=11 // pred_fallthru
          _
      $region12: #{tpu_custom_call.1} parent=5 // pred_fallthru
        _
      %p121 = scmp.lt.s32.totalorder %s14, 2
      // Predicated region
      $region17: #{tpu_custom_call.1} parent=5 // pred_check
        %p122 = pneg %p121
      $region18: #{tpu_custom_call.1} parent=5 // pred_check_branch
        %124 = sbr.rel (%p122) target = $region20
      $region19: #{tpu_custom_call.1} parent=5 // pred_region
        // Predicated region
        $region21: #{tpu_custom_call.1} parent=19 // pred_check
          %p125 = pneg %p48
        $region22: #{tpu_custom_call.1} parent=19 // pred_check_branch
          %127 = sbr.rel (%p125) target = $region24
        $region23: #{tpu_custom_call.1} parent=19 // pred_region
          %s128 = sand.u32 %s38, 1
          %s129 = scalar_lea.sflag [#allocation3], %s128
          %s130 = sand.u32 %s38, 1
          %s131 = smul.addr %s130, 8
          %s132 = scalar_lea.vmem [#allocation2], %s131
          %s133 = smul.u32 2, %s22
          %135 = vsyncadd %s129, 0
          %s136 = smul.addr %s21, 2
          %s137 = sadd.s32 %s133, %s136
          %s138 = smul.addr %s137, 4
          %s139 = scalar_lea.hbm %s0, %s138
          %s141 = sshll.u32 %s139, 4
          %s142 = int_to_ptr.hbm [resolvable:$true] %s141
          %s143 = sshll.u32 %s132, 4
          %s144 = int_to_ptr.vmem [resolvable:$true] %s143
          %146 = dma.hbm_to_vmem [thread:$0]  %s142, 128, %s144, %s129
        $region24: #{tpu_custom_call.1} parent=19 // pred_fallthru
          _
      $region20: #{tpu_custom_call.1} parent=5 // pred_fallthru
        _
      %p147 = scmp.le.s32.totalorder 1, %s14
      %p148 = scmp.lt.s32.totalorder %s14, 3
      %p149 = pnand %p147, %p148
      %p150 = pneg %p149
      // Predicated region
      $region25: #{tpu_custom_call.1} parent=5 // pred_check
        _
      $region26: #{tpu_custom_call.1} parent=5 // pred_check_branch
        %152 = sbr.rel (%p149) target = $region28
      $region27: #{tpu_custom_call.1} parent=5 // pred_region
        %s153 = ssub.s32 %s14, 1
        %s154 = sand.u32 %s41, 1
        %s155 = scalar_lea.sflag [#allocation3], %s154
        %s156 = sand.u32 %s41, 1
        %s157 = smul.addr %s156, 8
        %s158 = scalar_lea.vmem [#allocation2], %s157
        // Predicated region
        $region29: #{tpu_custom_call.1} parent=27 // pred_check
          %p159 = pneg %p54
        $region30: #{tpu_custom_call.1} parent=27 // pred_check_branch
          %161 = sbr.rel (%p159) target = $region32
        $region31: #{tpu_custom_call.1} parent=27 // pred_region
          %163 = dma.done %s155, 128
        $region32: #{tpu_custom_call.1} parent=27 // pred_fallthru
          _
        %s164 = sand.u32 %s41, 1
        %s165 = scalar_lea.sflag [#allocation3], %s164
        %s166 = sand.u32 %s41, 1
        %s167 = smul.addr %s166, 8
        %s168 = scalar_lea.vmem [#allocation2], %s167
        %p169 = pneg %p54
        %p170 = pneg %p51
        %p171 = pneg %p75
        %p172 = pneg %p72
        %p173 = pneg %p103
        %p174 = pneg %p100
        %s175 = sand.u32 %s90, 1
        %s176 = scalar_lea.sflag [#allocation4], %s175
        %s177 = sand.u32 %s90, 1
        %s178 = smul.addr %s177, 8
        %s179 = scalar_lea.vmem [#allocation5], %s178
        %s180 = smul.u32 2, %s24
        %s181 = smul.u32 2, %s24
        %v182 = vld [vmem:[%s158] sm:$0xff]
        %v183 = vld [vmem:[%s1] sm:$0xf]
        %v184 = vld [vmem:[%s1 + $0x4] sm:$0xf]
        %186 = vst [vmem:[#allocation1] ss:$2 sm:$0xff] %v182
        %v187 = vld.sshfl [vmem:[#allocation1] sm:$0xff pattern:$0x75316420]
        %v188 = vld.sshfl [vmem:[#allocation1 + $0x8] sm:$0xff pattern:$0x75316420]
        %vm191 = vcmask 1043456
        %v192 = vsel %vm191, %v187, 0.0
        %v193 = vrot.slane %v192, 4
        %v194 = vadd.f32 %v192, %v193
        %v195 = vrot.slane %v194, 2
        %v196 = vadd.f32 %v194, %v195
        %v197 = vrot.slane %v196, 1
        %v198 = vadd.f32 %v196, %v197
        %v199 = vsel %vm191, %v188, 0.0
        %v200 = vrot.slane %v199, 4
        %v201 = vadd.f32 %v199, %v200
        %v202 = vrot.slane %v201, 2
        %v203 = vadd.f32 %v201, %v202
        %v204 = vrot.slane %v203, 1
        %v205 = vadd.f32 %v203, %v204
        %v206 = vrcp.pop 4.0
        %v207 = vmul.f32 4.0, %v206
        %v208 = vsub.f32 1.0, %v207
        %v209 = vmul.f32 %v206, %v208
        %v210 = vadd.f32 %v206, %v209
        %vm211 = vweird.f32 %v206
        %v212 = vsel %vm211, %v206, %v210
        %v213 = vmul.f32 %v198, %v212
        %v214 = vmul.f32 %v205, %v212
        %v217 = vrot.slane %v214, 4
        %v218 = vsel %vm191, %v213, %v217
        %v220 = vsub.f32 %v182, %v218
        %v221 = vmul.f32 %v220, %v220
        %223 = vst [vmem:[#allocation1] ss:$2 sm:$0xff] %v221
        %v224 = vld.sshfl [vmem:[#allocation1] sm:$0xff pattern:$0x75316420]
        %v225 = vld.sshfl [vmem:[#allocation1 + $0x8] sm:$0xff pattern:$0x75316420]
        %v228 = vsel %vm191, %v224, 0.0
        %v229 = vrot.slane %v228, 4
        %v230 = vadd.f32 %v228, %v229
        %v231 = vrot.slane %v230, 2
        %v232 = vadd.f32 %v230, %v231
        %v233 = vrot.slane %v232, 1
        %v234 = vadd.f32 %v232, %v233
        %v235 = vsel %vm191, %v225, 0.0
        %v236 = vrot.slane %v235, 4
        %v237 = vadd.f32 %v235, %v236
        %v238 = vrot.slane %v237, 2
        %v239 = vadd.f32 %v237, %v238
        %v240 = vrot.slane %v239, 1
        %v241 = vadd.f32 %v239, %v240
        %v242 = vmul.f32 %v234, %v212
        %v243 = vmul.f32 %v241, %v212
        %v244 = vadd.f32 %v242, 1e-05
        %v245 = vadd.f32 %v243, 1e-05
        %v246 = vrsqrt.pop %v244
        %v247 = vmul.f32 %v246, %v244
        %v248 = vmul.f32 %v247, %v246
        %v249 = vmul.f32 0.5, %v248
        %v250 = vsub.f32 1.5, %v249
        %v251 = vmul.f32 %v246, %v250
        %vm252 = vweird.f32 %v244
        %vm253 = vweird.f32 %v246
        %vm254 = vmor %vm252, %vm253
        %v255 = vsel %vm254, %v246, %v251
        %v256 = vrsqrt.pop %v245
        %v257 = vmul.f32 %v256, %v245
        %v258 = vmul.f32 %v257, %v256
        %v259 = vmul.f32 0.5, %v258
        %v260 = vsub.f32 1.5, %v259
        %v261 = vmul.f32 %v256, %v260
        %vm262 = vweird.f32 %v245
        %vm263 = vweird.f32 %v256
        %vm264 = vmor %vm262, %vm263
        %v265 = vsel %vm264, %v256, %v261
        %v268 = vrot.slane %v265, 4
        %v269 = vsel %vm191, %v255, %v268
        %v271 = vmul.f32 %v220, %v269
        %273 = vset.pattern.permute.xlu0 0
        %274 = vperm.xlu0 %273, %v183
        %v275 = vpop.permute.xlu0 %274
        %v277 = vunpack.c.l.s4 839922192
        %v278 = vunpack.c.0.s8 %v277
        %v279 = vperm.slane %v275, %v278
        %v281 = vmul.f32 %v271, %v279
        %283 = vset.pattern.permute.xlu0 0
        %284 = vperm.xlu0 %283, %v184
        %v285 = vpop.permute.xlu0 %284
        %v287 = vunpack.c.l.s4 839922192
        %v288 = vunpack.c.0.s8 %v287
        %v289 = vperm.slane %v285, %v288
        %v291 = vadd.f32 %v281, %v289
        %292 = vst [vmem:[%s179] sm:$0xff] %v291
        %s293 = sand.u32 %s90, 1
        %s294 = scalar_lea.sflag [#allocation4], %s293
        %s295 = sand.u32 %s90, 1
        %s296 = smul.addr %s295, 8
        %s297 = scalar_lea.vmem [#allocation5], %s296
        // Predicated region
        $region33: #{tpu_custom_call.1} parent=27 // pred_check
          %p298 = pneg %p100
        $region34: #{tpu_custom_call.1} parent=27 // pred_check_branch
          %300 = sbr.rel (%p298) target = $region36
        $region35: #{tpu_custom_call.1} parent=27 // pred_region
          %s301 = smul.u32 2, %s24
          %303 = vsyncadd %s294, 0
          %s304 = smul.addr %s23, 2
          %s305 = sadd.s32 %s301, %s304
          %s306 = smul.addr %s305, 4
          %s307 = scalar_lea.hbm %s2, %s306
          %s309 = sshll.u32 %s297, 4
          %s310 = int_to_ptr.vmem [resolvable:$true] %s309
          %s311 = sshll.u32 %s307, 4
          %s312 = int_to_ptr.hbm [resolvable:$true] %s311
          %314 = dma.vmem_to_hbm [thread:$0]  %s310, 128, %s312, %s294
        $region36: #{tpu_custom_call.1} parent=27 // pred_fallthru
          _
      $region28: #{tpu_custom_call.1} parent=5 // pred_fallthru
        _
      %p315 = scmp.le.s32.totalorder 2, %s14
      // Predicated region
      $region37: #{tpu_custom_call.1} parent=5 // pred_check
        %p316 = pneg %p315
      $region38: #{tpu_custom_call.1} parent=5 // pred_check_branch
        %318 = sbr.rel (%p316) target = $region40
      $region39: #{tpu_custom_call.1} parent=5 // pred_region
        %s319 = ssub.s32 %s14, 2
        // Predicated region
        $region41: #{tpu_custom_call.1} parent=39 // pred_check
          %p320 = pneg %p106
        $region42: #{tpu_custom_call.1} parent=39 // pred_check_branch
          %322 = sbr.rel (%p320) target = $region44
        $region43: #{tpu_custom_call.1} parent=39 // pred_region
          %s323 = sand.u32 %s91, 1
          %s324 = scalar_lea.sflag [#allocation4], %s323
          %s325 = sand.u32 %s91, 1
          %s326 = smul.addr %s325, 8
          %s327 = scalar_lea.vmem [#allocation5], %s326
          %329 = dma.done %s324, 128
        $region44: #{tpu_custom_call.1} parent=39 // pred_fallthru
          _
      $region40: #{tpu_custom_call.1} parent=5 // pred_fallthru
        _
    $region6: #{tpu_custom_call.1} parent=1 // loop_footer
      %s18 = sadd.s32 1, %s14
    $region7: #{tpu_custom_call.1} parent=1 // loop_footer_branch
      %13 = sbr.rel target = $region3
    $region8: #{tpu_custom_call.1} parent=1 // loop_exit
      _
    %330 = vsyncpa [#allocation3], 1
    %s331 = scalar_lea.sflag [#allocation3], 1
    %332 = vsyncpa %s331, 1
    %333 = vsyncpa [#allocation4], 1
    %s334 = scalar_lea.sflag [#allocation4], 1
    %335 = vsyncpa %s334, 1

</llo_original>
